<compile_context>
chip_gen: v5e
topology: v5e:2x2
jax: 0.10.0
libtpu: 0.0.40
codegen_flags: <defaults>
</compile_context>

<pallas_src>
import math
import functools

import jax
import jax.numpy as jnp
from jax import lax
from jax.experimental import pallas as pl
from jax.experimental.pallas import tpu as pltpu

NEG_SLOPE = 0.2  # nn.LeakyReLU(negative_slope=0.2)


def _round_up(n, m):
    return ((n + m - 1) // m) * m


# --------------------------------- kernel -----------------------------------
def fc3_kernel(x_ref, w1t_ref, b1_ref, w2t_ref, b2_ref, w3_ref, b3_ref, o_ref):
    """One (TB, F) batch tile through the whole 3-layer head.

    x_ref   : (TB, F) f32   (cast to bf16 in-kernel, right before the MXU)
    w1t/w2t : (F, F)  bf16  (pre-transposed, single-buffered, VMEM-resident)
    b1/b2   : (1, F)  f32
    w3_ref  : (1, F)  f32   (last layer as a lane-dense row)
    b3_ref  : (1, 1)  f32   (scalar, SMEM)
    o_ref   : (1, TB) f32   (lane-dense sigmoid outputs for this batch tile)
    """
    # --- linear1 + LeakyReLU(0.2) ------------------------------------- MXU
    x = x_ref[...].astype(jnp.bfloat16)          # free VPU cast, f32 HBM read
    h = jnp.dot(x, w1t_ref[...], preferred_element_type=jnp.float32)
    h = h + b1_ref[...]
    h = jnp.maximum(h, NEG_SLOPE * h)
    # --- linear2 + LeakyReLU(0.2) ------------------------------------- MXU
    h = jnp.dot(h.astype(jnp.bfloat16), w2t_ref[...],
                preferred_element_type=jnp.float32)
    h = h + b2_ref[...]
    h = jnp.maximum(h, NEG_SLOPE * h)
    # --- linear3 (F -> 1): contract F against the (1, F) row so the result is
    # already a lane-dense (1, TB) vector; add bias, sigmoid, unmasked store.
    logit = lax.dot_general(
        w3_ref[...], h,
        dimension_numbers=(((1,), (1,)), ((), ())),
        preferred_element_type=jnp.float32) + b3_ref[0, 0]
    o_ref[...] = jax.nn.sigmoid(logit).astype(o_ref.dtype)


# ---------------------------- parameter setup -------------------------------
def prepare_params(params):
    """One-time prep: transpose the (out,in) Linear weights to (in,out), cast
    the big FxF weights to bf16, and shape biases / last-layer row for lanes."""
    F = params["w1"].shape[0]
    return dict(
        w1t=params["w1"].T.astype(jnp.bfloat16),               # (F, F)
        w2t=params["w2"].T.astype(jnp.bfloat16),               # (F, F)
        w3=params["w3"].reshape(1, F).astype(jnp.float32),     # (1, F)
        b1=params["b1"].reshape(1, F).astype(jnp.float32),
        b2=params["b2"].reshape(1, F).astype(jnp.float32),
        b3=params["b3"].reshape(1, 1).astype(jnp.float32),
    )


# --------------------------------- wrapper ----------------------------------
@functools.partial(jax.jit, static_argnames=("tb",))
def fc3_forward(x, prep, *, tb=512):
    B, F = x.shape
    # Keep the batch tile a multiple of 128: f32 x tile sublanes, MXU rows, and
    # a lane-dense (1, tb) output block all stay aligned.
    tb = _round_up(min(tb, _round_up(B, 128)), 128)
    grid_b = pl.cdiv(B, tb)
    Bp = grid_b * tb
    if Bp != B:
        # Rare fallback for ragged batches; for best perf pick tb | B so no
        # extra HBM pass is spent on padding (demo shapes avoid this branch).
        x = jnp.pad(x, ((0, Bp - B), (0, 0)))

    const = dict(pipeline_mode=pl.Buffered(1))  # single-buffer constant blocks

    out_row = pl.pallas_call(
        fc3_kernel,
        out_shape=jax.ShapeDtypeStruct((1, Bp), jnp.float32),
        grid=(grid_b,),
        in_specs=[
            pl.BlockSpec((tb, F), lambda i: (i, 0)),            # x tile (f32)
            pl.BlockSpec((F, F), lambda i: (0, 0), **const),    # w1t bf16
            pl.BlockSpec((1, F), lambda i: (0, 0), **const),    # b1
            pl.BlockSpec((F, F), lambda i: (0, 0), **const),    # w2t bf16
            pl.BlockSpec((1, F), lambda i: (0, 0), **const),    # b2
            pl.BlockSpec((1, F), lambda i: (0, 0), **const),    # w3 row
            pl.BlockSpec(memory_space=pltpu.MemorySpace.SMEM),  # b3 scalar
        ],
        out_specs=pl.BlockSpec((1, tb), lambda i: (0, i)),      # lane-dense
        compiler_params=pltpu.CompilerParams(
            dimension_semantics=("parallel",),
            # v5e's default scoped VMEM is only 16 MiB; raise it so large F
            # never forces premature K-tiling on any generation.
            vmem_limit_bytes=32 * 1024 * 1024,
        ),
        cost_estimate=pl.CostEstimate(
            flops=4 * Bp * F * F + 2 * Bp * F,
            transcendentals=Bp,
            bytes_accessed=4 * Bp * F + 4 * F * F + 12 * F + 4 * Bp + 4,
        ),
    )(x, prep["w1t"], prep["b1"], prep["w2t"], prep["b2"],
      prep["w3"], prep["b3"])
    return out_row[0, :B].reshape(B, 1)


# --------------------- pure-f32 PyTorch-semantics reference ------------------
def fc3_reference(x, params):
    h = x @ params["w1"].T + params["b1"]
    h = jnp.where(h >= 0, h, NEG_SLOPE * h)
    h = h @ params["w2"].T + params["b2"]
    h = jnp.where(h >= 0, h, NEG_SLOPE * h)
    logit = h @ params["w3"].T + params["b3"]
    return jax.nn.sigmoid(logit)


if __name__ == "__main__":
    key = jax.random.PRNGKey(0)
    k1, k2, k3, k4, k5, k6, kx = jax.random.split(key, 7)

    B, F = 512, 128                     # F lane-aligned; B=2*256 -> grid_b=2
    bound = 1.0 / math.sqrt(F)          # nn.Linear default init bounds
    params = dict(
        w1=jax.random.uniform(k1, (F, F), jnp.float32, -bound, bound),
        b1=jax.random.uniform(k2, (F,), jnp.float32, -bound, bound),
        w2=jax.random.uniform(k3, (F, F), jnp.float32, -bound, bound),
        b2=jax.random.uniform(k4, (F,), jnp.float32, -bound, bound),
        w3=jax.random.uniform(k5, (1, F), jnp.float32, -bound, bound),
        b3=jax.random.uniform(k6, (1,), jnp.float32, -bound, bound),
    )
    x = jax.random.normal(kx, (B, F), jnp.float32)

    prep = prepare_params(params)       # transpose + bf16 cast happens ONCE
    out = fc3_forward(x, prep, tb=256)  # grid=(2,): even, splits across 2 TCs
    jax.block_until_ready(out)

    ref = fc3_reference(x, params)      # full-f32 reference of the nn.Module
    assert out.shape == (B, 1)
    assert bool(jnp.all(jnp.isfinite(out)))
    assert float(jnp.max(jnp.abs(out - ref))) < 2e-2   # bf16-weight tolerance
    print("KERNEL_OK")
</pallas_src>

<mosaic_0001>
module attributes {stable_mosaic.version = 11 : i64} {
  func.func @fc3_kernel(%arg0: i32, %arg1: memref<256x128xf32, #tpu.memory_space<vmem>>, %arg2: memref<128x128xbf16, #tpu.memory_space<vmem>>, %arg3: memref<1x128xf32, #tpu.memory_space<vmem>>, %arg4: memref<128x128xbf16, #tpu.memory_space<vmem>>, %arg5: memref<1x128xf32, #tpu.memory_space<vmem>>, %arg6: memref<1x128xf32, #tpu.memory_space<vmem>>, %arg7: memref<1x1xf32, #tpu.memory_space<smem>>, %arg8: memref<1x256xf32, #tpu.memory_space<vmem>>) attributes {dimension_semantics = [#tpu.dimension_semantics<parallel>], iteration_bounds = array<i64: 2>, scalar_prefetch = 0 : i64, scratch_operands = 0 : i64, tpu.core_type = #tpu.core_type<tc>, window_params = [{transform_indices = @transform_0, window_bounds = array<i64: 256, 128>}, {pipeline_mode = #tpu.pipeline_mode<synchronous>, transform_indices = @transform_1, window_bounds = array<i64: 128, 128>}, {pipeline_mode = #tpu.pipeline_mode<synchronous>, transform_indices = @transform_2, window_bounds = array<i64: 1, 128>}, {pipeline_mode = #tpu.pipeline_mode<synchronous>, transform_indices = @transform_3, window_bounds = array<i64: 128, 128>}, {pipeline_mode = #tpu.pipeline_mode<synchronous>, transform_indices = @transform_4, window_bounds = array<i64: 1, 128>}, {pipeline_mode = #tpu.pipeline_mode<synchronous>, transform_indices = @transform_5, window_bounds = array<i64: 1, 128>}, {transform_indices = @transform_6, window_bounds = array<i64: 1, 1>}, {transform_indices = @transform_7, window_bounds = array<i64: 1, 256>}]} {
    %c0 = arith.constant 0 : index
    %c0_0 = arith.constant 0 : index
    %0 = vector.load %arg1[%c0, %c0_0] : memref<256x128xf32, #tpu.memory_space<vmem>>, vector<256x128xf32>
    %1 = arith.truncf %0 : vector<256x128xf32> to vector<256x128xbf16>
    %c0_1 = arith.constant 0 : index
    %c0_2 = arith.constant 0 : index
    %2 = vector.load %arg2[%c0_1, %c0_2] : memref<128x128xbf16, #tpu.memory_space<vmem>>, vector<128x128xbf16>
    %cst = arith.constant dense<0.000000e+00> : vector<256x128xf32>
    %3 = tpu.matmul %1, %2, %cst {dimension_numbers = #tpu.dot_dimension_numbers<[1], [0], [0], [1], [0, 0, 1, 1], [], []>} : vector<256x128xbf16>, vector<128x128xbf16>, vector<256x128xf32> -> vector<256x128xf32>
    %c0_3 = arith.constant 0 : index
    %c0_4 = arith.constant 0 : index
    %4 = vector.load %arg3[%c0_3, %c0_4] : memref<1x128xf32, #tpu.memory_space<vmem>>, vector<1x128xf32>
    %5 = vector.broadcast %4 : vector<1x128xf32> to vector<256x128xf32>
    %6 = arith.addf %3, %5 : vector<256x128xf32>
    %cst_5 = arith.constant 2.000000e-01 : f32
    %7 = vector.broadcast %cst_5 : f32 to vector<256x128xf32>
    %8 = arith.mulf %7, %6 : vector<256x128xf32>
    %9 = arith.maximumf %6, %8 : vector<256x128xf32>
    %10 = arith.truncf %9 : vector<256x128xf32> to vector<256x128xbf16>
    %c0_6 = arith.constant 0 : index
    %c0_7 = arith.constant 0 : index
    %11 = vector.load %arg4[%c0_6, %c0_7] : memref<128x128xbf16, #tpu.memory_space<vmem>>, vector<128x128xbf16>
    %cst_8 = arith.constant dense<0.000000e+00> : vector<256x128xf32>
    %12 = tpu.matmul %10, %11, %cst_8 {dimension_numbers = #tpu.dot_dimension_numbers<[1], [0], [0], [1], [0, 0, 1, 1], [], []>} : vector<256x128xbf16>, vector<128x128xbf16>, vector<256x128xf32> -> vector<256x128xf32>
    %c0_9 = arith.constant 0 : index
    %c0_10 = arith.constant 0 : index
    %13 = vector.load %arg5[%c0_9, %c0_10] : memref<1x128xf32, #tpu.memory_space<vmem>>, vector<1x128xf32>
    %14 = vector.broadcast %13 : vector<1x128xf32> to vector<256x128xf32>
    %15 = arith.addf %12, %14 : vector<256x128xf32>
    %cst_11 = arith.constant 2.000000e-01 : f32
    %16 = vector.broadcast %cst_11 : f32 to vector<256x128xf32>
    %17 = arith.mulf %16, %15 : vector<256x128xf32>
    %18 = arith.maximumf %15, %17 : vector<256x128xf32>
    %c0_12 = arith.constant 0 : index
    %c0_13 = arith.constant 0 : index
    %19 = vector.load %arg6[%c0_12, %c0_13] : memref<1x128xf32, #tpu.memory_space<vmem>>, vector<1x128xf32>
    %cst_14 = arith.constant dense<0.000000e+00> : vector<1x256xf32>
    %20 = tpu.matmul %19, %18, %cst_14 {dimension_numbers = #tpu.dot_dimension_numbers<[1], [1], [0], [0], [0, 0, 1, 0], [], []>} : vector<1x128xf32>, vector<256x128xf32>, vector<1x256xf32> -> vector<1x256xf32>
    %c0_15 = arith.constant 0 : index
    %c0_16 = arith.constant 0 : index
    %21 = memref.load %arg7[%c0_15, %c0_16] : memref<1x1xf32, #tpu.memory_space<smem>>
    %22 = vector.broadcast %21 : f32 to vector<1x256xf32>
    %23 = arith.addf %20, %22 : vector<1x256xf32>
    %24 = arith.negf %23 : vector<1x256xf32>
    %25 = math.exp %24 : vector<1x256xf32>
    %cst_17 = arith.constant 1.000000e+00 : f32
    %26 = vector.broadcast %cst_17 : f32 to vector<1x256xf32>
    %27 = arith.addf %26, %25 : vector<1x256xf32>
    %28 = arith.divf %26, %27 : vector<1x256xf32>
    %c0_18 = arith.constant 0 : index
    %c0_19 = arith.constant 0 : index
    %29 = vector.load %arg8[%c0_18, %c0_19] : memref<1x256xf32, #tpu.memory_space<vmem>>, vector<1x256xf32>
    tpu.vector_store %arg8[%c0_18, %c0_19], %28 {strides = array<i32>} : memref<1x256xf32, #tpu.memory_space<vmem>>, vector<1x256xf32>,
    return
  }
  func.func @transform_0(%arg0: i32) -> (i32, i32) {
    %c0_i32 = arith.constant 0 : i32
    %c0_i32_0 = arith.constant 0 : i32
    return %arg0, %c0_i32 : i32, i32
  }
  func.func @transform_1(%arg0: i32) -> (i32, i32) {
    %c0_i32 = arith.constant 0 : i32
    %c0_i32_0 = arith.constant 0 : i32
    %c0_i32_1 = arith.constant 0 : i32
    return %c0_i32, %c0_i32_0 : i32, i32
  }
  func.func @transform_2(%arg0: i32) -> (i32, i32) {
    %c0_i32 = arith.constant 0 : i32
    %c0_i32_0 = arith.constant 0 : i32
    %c0_i32_1 = arith.constant 0 : i32
    return %c0_i32, %c0_i32_0 : i32, i32
  }
  func.func @transform_3(%arg0: i32) -> (i32, i32) {
    %c0_i32 = arith.constant 0 : i32
    %c0_i32_0 = arith.constant 0 : i32
    %c0_i32_1 = arith.constant 0 : i32
    return %c0_i32, %c0_i32_0 : i32, i32
  }
  func.func @transform_4(%arg0: i32) -> (i32, i32) {
    %c0_i32 = arith.constant 0 : i32
    %c0_i32_0 = arith.constant 0 : i32
    %c0_i32_1 = arith.constant 0 : i32
    return %c0_i32, %c0_i32_0 : i32, i32
  }
  func.func @transform_5(%arg0: i32) -> (i32, i32) {
    %c0_i32 = arith.constant 0 : i32
    %c0_i32_0 = arith.constant 0 : i32
    %c0_i32_1 = arith.constant 0 : i32
    return %c0_i32, %c0_i32_0 : i32, i32
  }
  func.func @transform_6(%arg0: i32) -> (i32, i32) {
    %c0_i32 = arith.constant 0 : i32
    %c0_i32_0 = arith.constant 0 : i32
    %c0_i32_1 = arith.constant 0 : i32
    return %c0_i32, %c0_i32_0 : i32, i32
  }
  func.func @transform_7(%arg0: i32) -> (i32, i32) {
    %c0_i32 = arith.constant 0 : i32
    %c0_i32_0 = arith.constant 0 : i32
    return %c0_i32, %arg0 : i32, i32
  }
}

</mosaic_0001>

<llo_original>
// kernel: fc3_forward.1
$region0: #{fc3_forward.1}
  #allocation0 [shape = 'u32[]', space=smem, size = 0x4, offset = 0x4, fixed_abs, tag = 'smem constant byte address 0x4 - core index']
  #allocation1 [shape = 'u32[72,128]{1,0:T(1,128)}', space=vmem, size = 0x9000, scoped, tag = 'internal scratch']
  #allocation2 [shape = 'f32[1,1]{1,0:T(1,128)S(6)}', space=smem, size = 0x200, scoped, tag = 'scoped memory for fc3_forward.1']
  %s0 = inlined_call_operand.hbm [shape: f32[512,128], index: 0, kind: input, shape index: {}]
  %s1 = inlined_call_operand.hbm [shape: bf16[128,128], index: 1, kind: input, shape index: {}]
  %s2 = inlined_call_operand.vmem [shape: f32[1,128], index: 2, kind: input, shape index: {}]
  %s3 = inlined_call_operand.hbm [shape: bf16[128,128], index: 3, kind: input, shape index: {}]
  %s4 = inlined_call_operand.vmem [shape: f32[1,128], index: 4, kind: input, shape index: {}]
  %s5 = inlined_call_operand.vmem [shape: f32[1,128], index: 5, kind: input, shape index: {}]
  %s6 = inlined_call_operand.<no memory space> [shape: f32[1,1], index: 6, kind: input, shape index: {}]
  %s7 = inlined_call_operand.hbm [shape: f32[1,512], index: 7, kind: output, shape index: {}]
  %s8 = sld [smem:[#allocation0]]
  $region73: #{fc3_forward.1} parent=0
    _
  %s10 = ssub.s32 1, %s8
  %s11 = scalar_select 0, %s10, %s8
  %12 = sst [smem:[#allocation2]] %s6
  $region1: #{fc3_forward.1} parent=0
    #allocation3 [shape = 'u8[262144]{0}', space=vmem, size = 0x40000, scoped, tag = 'input window, operand 0']
    #allocation4 [shape = 's32[2]{0}', space=sflag, size = 0x8, scoped, tag = 'scoped memory for fc3_forward.1']
    #allocation5 [shape = 's32[2]{0}', space=sflag, size = 0x8, scoped, tag = 'scoped memory for fc3_forward.1']
    #allocation6 [shape = 'u8[32768]{0}', space=vmem, size = 0x8000, scoped, tag = 'input window, operand 1, single buffered']
    #allocation7 [shape = 's32[1]{0}', space=sflag, size = 0x4, scoped, tag = 'scoped memory for fc3_forward.1']
    #allocation8 [shape = 'u8[32768]{0}', space=vmem, size = 0x8000, scoped, tag = 'input window, operand 3, single buffered']
    #allocation9 [shape = 'u8[2048]{0}', space=vmem, size = 0x800, scoped, tag = 'output window, operand 0']
    %13 = vsyncpa [#allocation4], 0
    %s14 = scalar_lea.sflag [#allocation4], 1
    %15 = vsyncpa %s14, 0
    %16 = vsyncpa [#allocation7], 0
    %17 = vsyncpa [#allocation5], 0
    %s18 = scalar_lea.sflag [#allocation5], 1
    %19 = vsyncpa %s18, 0
    loop: start=0, step=1, limit=4
    $region2: #{fc3_forward.1} parent=1 // loop_pre_header
      _
    $region3: #{fc3_forward.1} parent=1 // loop_header
      %s21 = sphi 0, %s25
      %p22 = scmp.ge.s32.totalorder %s21, 4
      %s31 = sphi 0, %s33
      %s34 = sphi 0, %s31
      %s35 = sphi 0, %s34
      %s51 = sphi 0, %s35
      %s55 = sphi 0, %s55
      %s57 = sphi 0, %s55
      %s58 = sphi 0, %s57
      %s72 = sphi 0, %s58
      %s76 = sphi 0, %s76
      %s78 = sphi 0, %s76
      %s79 = sphi 0, %s78
      %s93 = sphi 0, %s79
      %s97 = sphi 0, %s97
      %s99 = sphi 0, %s97
      %s100 = sphi 0, %s99
      %s114 = sphi 0, %s100
      %s118 = sphi 0, %s118
      %s120 = sphi 0, %s118
      %s121 = sphi 0, %s120
      %s135 = sphi 0, %s121
      %s139 = sphi 0, %s139
      %s141 = sphi 0, %s139
      %s142 = sphi 0, %s141
      %s156 = sphi 0, %s142
      %s160 = sphi 0, %s160
      %s162 = sphi 0, %s160
      %s163 = sphi 0, %s162
      %s177 = sphi 0, %s163
      %s183 = sphi 0, %s185
      %s186 = sphi 0, %s183
      %s187 = sphi 0, %s186
      %s203 = sphi 0, %s187
    $region4: #{fc3_forward.1} parent=1 // loop_header_branch
      %24 = sbr.rel (%p22) target = $region8
    $region5: #{fc3_forward.1} parent=1 // loop_body
      %s26 = ssub.s32 %s21, 1
      %s27 = ssub.s32 %s21, 2
      %s28 = sadd.s32 %s21, 1
      %s29 = ssub.s32 %s21, %s28
      %p30 = scmp.eq.s32.totalorder %s29, 0
      %s32 = sadd.s32 %s31, 1
      %s33 = scalar_select %p30, %s31, %s32
      %p36 = pneg %p30
      %p37 = scmp.eq.s32.totalorder %s21, 1
      %p38 = por %p36, %p37
      %p39 = scmp.ne.s32.totalorder %s31, %s34
      %p40 = scmp.eq.s32.totalorder %s21, 0
      %p41 = por %p39, %p40
      %p42 = scmp.ne.s32.totalorder %s31, %s34
      %p43 = scmp.eq.s32.totalorder %s26, 1
      %p44 = por %p42, %p43
      %p45 = scmp.ne.s32.totalorder %s34, %s35
      %p46 = scmp.eq.s32.totalorder %s26, 0
      %p47 = por %p45, %p46
      %p48 = scmp.ne.s32.totalorder %s34, %s35
      %p49 = scmp.eq.s32.totalorder %s27, 1
      %p50 = por %p48, %p49
      %p52 = scmp.ne.s32.totalorder %s35, %s51
      %p53 = scmp.eq.s32.totalorder %s27, 0
      %p54 = por %p52, %p53
      %s56 = sadd.s32 %s55, 1
      %p59 = scmp.eq.s32.totalorder %s21, 1
      %p60 = scmp.ne.s32.totalorder %s55, %s57
      %p61 = scmp.eq.s32.totalorder %s21, 0
      %p62 = por %p60, %p61
      %p63 = scmp.ne.s32.totalorder %s55, %s57
      %p64 = scmp.eq.s32.totalorder %s26, 1
      %p65 = por %p63, %p64
      %p66 = scmp.ne.s32.totalorder %s57, %s58
      %p67 = scmp.eq.s32.totalorder %s26, 0
      %p68 = por %p66, %p67
      %p69 = scmp.ne.s32.totalorder %s57, %s58
      %p70 = scmp.eq.s32.totalorder %s27, 1
      %p71 = por %p69, %p70
      %p73 = scmp.ne.s32.totalorder %s58, %s72
      %p74 = scmp.eq.s32.totalorder %s27, 0
      %p75 = por %p73, %p74
      %s77 = sadd.s32 %s76, 1
      %p80 = scmp.eq.s32.totalorder %s21, 1
      %p81 = scmp.ne.s32.totalorder %s76, %s78
      %p82 = scmp.eq.s32.totalorder %s21, 0
      %p83 = por %p81, %p82
      %p84 = scmp.ne.s32.totalorder %s76, %s78
      %p85 = scmp.eq.s32.totalorder %s26, 1
      %p86 = por %p84, %p85
      %p87 = scmp.ne.s32.totalorder %s78, %s79
      %p88 = scmp.eq.s32.totalorder %s26, 0
      %p89 = por %p87, %p88
      %p90 = scmp.ne.s32.totalorder %s78, %s79
      %p91 = scmp.eq.s32.totalorder %s27, 1
      %p92 = por %p90, %p91
      %p94 = scmp.ne.s32.totalorder %s79, %s93
      %p95 = scmp.eq.s32.totalorder %s27, 0
      %p96 = por %p94, %p95
      %s98 = sadd.s32 %s97, 1
      %p101 = scmp.eq.s32.totalorder %s21, 1
      %p102 = scmp.ne.s32.totalorder %s97, %s99
      %p103 = scmp.eq.s32.totalorder %s21, 0
      %p104 = por %p102, %p103
      %p105 = scmp.ne.s32.totalorder %s97, %s99
      %p106 = scmp.eq.s32.totalorder %s26, 1
      %p107 = por %p105, %p106
      %p108 = scmp.ne.s32.totalorder %s99, %s100
      %p109 = scmp.eq.s32.totalorder %s26, 0
      %p110 = por %p108, %p109
      %p111 = scmp.ne.s32.totalorder %s99, %s100
      %p112 = scmp.eq.s32.totalorder %s27, 1
      %p113 = por %p111, %p112
      %p115 = scmp.ne.s32.totalorder %s100, %s114
      %p116 = scmp.eq.s32.totalorder %s27, 0
      %p117 = por %p115, %p116
      %s119 = sadd.s32 %s118, 1
      %p122 = scmp.eq.s32.totalorder %s21, 1
      %p123 = scmp.ne.s32.totalorder %s118, %s120
      %p124 = scmp.eq.s32.totalorder %s21, 0
      %p125 = por %p123, %p124
      %p126 = scmp.ne.s32.totalorder %s118, %s120
      %p127 = scmp.eq.s32.totalorder %s26, 1
      %p128 = por %p126, %p127
      %p129 = scmp.ne.s32.totalorder %s120, %s121
      %p130 = scmp.eq.s32.totalorder %s26, 0
      %p131 = por %p129, %p130
      %p132 = scmp.ne.s32.totalorder %s120, %s121
      %p133 = scmp.eq.s32.totalorder %s27, 1
      %p134 = por %p132, %p133
      %p136 = scmp.ne.s32.totalorder %s121, %s135
      %p137 = scmp.eq.s32.totalorder %s27, 0
      %p138 = por %p136, %p137
      %s140 = sadd.s32 %s139, 1
      %p143 = scmp.eq.s32.totalorder %s21, 1
      %p144 = scmp.ne.s32.totalorder %s139, %s141
      %p145 = scmp.eq.s32.totalorder %s21, 0
      %p146 = por %p144, %p145
      %p147 = scmp.ne.s32.totalorder %s139, %s141
      %p148 = scmp.eq.s32.totalorder %s26, 1
      %p149 = por %p147, %p148
      %p150 = scmp.ne.s32.totalorder %s141, %s142
      %p151 = scmp.eq.s32.totalorder %s26, 0
      %p152 = por %p150, %p151
      %p153 = scmp.ne.s32.totalorder %s141, %s142
      %p154 = scmp.eq.s32.totalorder %s27, 1
      %p155 = por %p153, %p154
      %p157 = scmp.ne.s32.totalorder %s142, %s156
      %p158 = scmp.eq.s32.totalorder %s27, 0
      %p159 = por %p157, %p158
      %s161 = sadd.s32 %s160, 1
      %p164 = scmp.eq.s32.totalorder %s21, 1
      %p165 = scmp.ne.s32.totalorder %s160, %s162
      %p166 = scmp.eq.s32.totalorder %s21, 0
      %p167 = por %p165, %p166
      %p168 = scmp.ne.s32.totalorder %s160, %s162
      %p169 = scmp.eq.s32.totalorder %s26, 1
      %p170 = por %p168, %p169
      %p171 = scmp.ne.s32.totalorder %s162, %s163
      %p172 = scmp.eq.s32.totalorder %s26, 0
      %p173 = por %p171, %p172
      %p174 = scmp.ne.s32.totalorder %s162, %s163
      %p175 = scmp.eq.s32.totalorder %s27, 1
      %p176 = por %p174, %p175
      %p178 = scmp.ne.s32.totalorder %s163, %s177
      %p179 = scmp.eq.s32.totalorder %s27, 0
      %p180 = por %p178, %p179
      %s181 = ssub.s32 %s21, %s28
      %p182 = scmp.eq.s32.totalorder %s181, 0
      %s184 = sadd.s32 %s183, 1
      %s185 = scalar_select %p182, %s183, %s184
      %p188 = pneg %p182
      %p189 = scmp.eq.s32.totalorder %s21, 1
      %p190 = por %p188, %p189
      %p191 = scmp.ne.s32.totalorder %s183, %s186
      %p192 = scmp.eq.s32.totalorder %s21, 0
      %p193 = por %p191, %p192
      %p194 = scmp.ne.s32.totalorder %s183, %s186
      %p195 = scmp.eq.s32.totalorder %s26, 1
      %p196 = por %p194, %p195
      %p197 = scmp.ne.s32.totalorder %s186, %s187
      %p198 = scmp.eq.s32.totalorder %s26, 0
      %p199 = por %p197, %p198
      %p200 = scmp.ne.s32.totalorder %s186, %s187
      %p201 = scmp.eq.s32.totalorder %s27, 1
      %p202 = por %p200, %p201
      %p204 = scmp.ne.s32.totalorder %s187, %s203
      %p205 = scmp.eq.s32.totalorder %s27, 0
      %p206 = por %p204, %p205
      %p207 = scmp.le.s32.totalorder 1, %s21
      %p208 = scmp.lt.s32.totalorder %s21, 3
      %p209 = pnand %p207, %p208
      %p210 = pneg %p209
      // Predicated region
      $region9: #{fc3_forward.1} parent=5 // pred_check
        _
      $region10: #{fc3_forward.1} parent=5 // pred_check_branch
        %212 = sbr.rel (%p209) target = $region12
      $region11: #{fc3_forward.1} parent=5 // pred_region
        %s213 = ssub.s32 %s21, 1
        // Predicated region
        $region13: #{fc3_forward.1} parent=11 // pred_check
          %p214 = pneg %p68
        $region14: #{fc3_forward.1} parent=11 // pred_check_branch
          %216 = sbr.rel (%p214) target = $region16
        $region15: #{fc3_forward.1} parent=11 // pred_region
          %218 = vsyncadd [#allocation7], 0
          %s219 = sshll.u32 %s1, 4
          %s220 = int_to_ptr.hbm [resolvable:$true] %s219
          %s221 = sshll.u32 [#allocation6], 4
          %s222 = int_to_ptr.vmem [resolvable:$true] %s221
          %227 = dma.hbm_to_vmem [thread:$0]  %s220, 1024, %s222, [#allocation7], 64, 64, 4
        $region16: #{fc3_forward.1} parent=11 // pred_fallthru
          _
        // Predicated region
        $region17: #{fc3_forward.1} parent=11 // pred_check
          %p228 = pneg %p89
        $region18: #{fc3_forward.1} parent=11 // pred_check_branch
          %230 = sbr.rel (%p228) target = $region20
        $region19: #{fc3_forward.1} parent=11 // pred_region
          _
        $region20: #{fc3_forward.1} parent=11 // pred_fallthru
          _
        // Predicated region
        $region21: #{fc3_forward.1} parent=11 // pred_check
          %p231 = pneg %p110
        $region22: #{fc3_forward.1} parent=11 // pred_check_branch
          %233 = sbr.rel (%p231) target = $region24
        $region23: #{fc3_forward.1} parent=11 // pred_region
          %235 = vsyncadd [#allocation7], 0
          %s236 = sshll.u32 %s3, 4
          %s237 = int_to_ptr.hbm [resolvable:$true] %s236
          %s238 = sshll.u32 [#allocation8], 4
          %s239 = int_to_ptr.vmem [resolvable:$true] %s238
          %244 = dma.hbm_to_vmem [thread:$0]  %s237, 1024, %s239, [#allocation7], 64, 64, 4
        $region24: #{fc3_forward.1} parent=11 // pred_fallthru
          _
        // Predicated region
        $region25: #{fc3_forward.1} parent=11 // pred_check
          %p245 = pneg %p131
        $region26: #{fc3_forward.1} parent=11 // pred_check_branch
          %247 = sbr.rel (%p245) target = $region28
        $region27: #{fc3_forward.1} parent=11 // pred_region
          _
        $region28: #{fc3_forward.1} parent=11 // pred_fallthru
          _
        // Predicated region
        $region29: #{fc3_forward.1} parent=11 // pred_check
          %p248 = pneg %p152
        $region30: #{fc3_forward.1} parent=11 // pred_check_branch
          %250 = sbr.rel (%p248) target = $region32
        $region31: #{fc3_forward.1} parent=11 // pred_region
          _
        $region32: #{fc3_forward.1} parent=11 // pred_fallthru
          _
        // Predicated region
        $region33: #{fc3_forward.1} parent=11 // pred_check
          %p251 = pneg %p173
        $region34: #{fc3_forward.1} parent=11 // pred_check_branch
          %253 = sbr.rel (%p251) target = $region36
        $region35: #{fc3_forward.1} parent=11 // pred_region
          _
        $region36: #{fc3_forward.1} parent=11 // pred_fallthru
          _
      $region12: #{fc3_forward.1} parent=5 // pred_fallthru
        _
      %p254 = scmp.lt.s32.totalorder %s21, 2
      // Predicated region
      $region37: #{fc3_forward.1} parent=5 // pred_check
        %p255 = pneg %p254
      $region38: #{fc3_forward.1} parent=5 // pred_check_branch
        %257 = sbr.rel (%p255) target = $region40
      $region39: #{fc3_forward.1} parent=5 // pred_region
        // Predicated region
        $region41: #{fc3_forward.1} parent=39 // pred_check
          %p258 = pneg %p41
        $region42: #{fc3_forward.1} parent=39 // pred_check_branch
          %260 = sbr.rel (%p258) target = $region44
        $region43: #{fc3_forward.1} parent=39 // pred_region
          %s261 = sand.u32 %s31, 1
          %s262 = scalar_lea.sflag [#allocation4], %s261
          %s263 = sand.u32 %s31, 1
          %s264 = smul.addr %s263, 256
          %s265 = scalar_lea.vmem [#allocation3], %s264
          %s266 = smul.u32 32, %s21
          %268 = vsyncadd %s262, 0
          %s269 = smul.addr %s266, 8
          %s270 = scalar_lea.hbm %s0, %s269
          %s271 = sshll.u32 %s270, 4
          %s272 = int_to_ptr.hbm [resolvable:$true] %s271
          %s273 = sshll.u32 %s265, 4
          %s274 = int_to_ptr.vmem [resolvable:$true] %s273
          %279 = dma.hbm_to_vmem [thread:$0]  %s272, 4096, %s274, %s262, 128, 128, 8
        $region44: #{fc3_forward.1} parent=39 // pred_fallthru
          _
      $region40: #{fc3_forward.1} parent=5 // pred_fallthru
        _
      %p280 = scmp.le.s32.totalorder 1, %s21
      %p281 = scmp.lt.s32.totalorder %s21, 3
      %p282 = pnand %p280, %p281
      %p283 = pneg %p282
      // Predicated region
      $region45: #{fc3_forward.1} parent=5 // pred_check
        _
      $region46: #{fc3_forward.1} parent=5 // pred_check_branch
        %285 = sbr.rel (%p282) target = $region48
      $region47: #{fc3_forward.1} parent=5 // pred_region
        %s286 = ssub.s32 %s21, 1
        %s287 = sand.u32 %s34, 1
        %s288 = scalar_lea.sflag [#allocation4], %s287
        %s289 = sand.u32 %s34, 1
        %s290 = smul.addr %s289, 256
        %s291 = scalar_lea.vmem [#allocation3], %s290
        // Predicated region
        $region49: #{fc3_forward.1} parent=47 // pred_check
          %p292 = pneg %p47
        $region50: #{fc3_forward.1} parent=47 // pred_check_branch
          %294 = sbr.rel (%p292) target = $region52
        $region51: #{fc3_forward.1} parent=47 // pred_region
          %296 = dma.done %s288, 4096
        $region52: #{fc3_forward.1} parent=47 // pred_fallthru
          _
        // Predicated region
        $region53: #{fc3_forward.1} parent=47 // pred_check
          %p297 = pneg %p68
        $region54: #{fc3_forward.1} parent=47 // pred_check_branch
          %299 = sbr.rel (%p297) target = $region56
        $region55: #{fc3_forward.1} parent=47 // pred_region
          %301 = dma.done [#allocation7], 1024
        $region56: #{fc3_forward.1} parent=47 // pred_fallthru
          _
        // Predicated region
        $region57: #{fc3_forward.1} parent=47 // pred_check
          %p302 = pneg %p110
        $region58: #{fc3_forward.1} parent=47 // pred_check_branch
          %304 = sbr.rel (%p302) target = $region60
        $region59: #{fc3_forward.1} parent=47 // pred_region
          %306 = dma.done [#allocation7], 1024
        $region60: #{fc3_forward.1} parent=47 // pred_fallthru
          _
        %s307 = sand.u32 %s34, 1
        %s308 = scalar_lea.sflag [#allocation4], %s307
        %s309 = sand.u32 %s34, 1
        %s310 = smul.addr %s309, 256
        %s311 = scalar_lea.vmem [#allocation3], %s310
        %p312 = pneg %p47
        %p313 = pneg %p44
        %p314 = pneg %p68
        %p315 = pneg %p65
        %p316 = pneg %p89
        %p317 = pneg %p86
        %p318 = pneg %p110
        %p319 = pneg %p107
        %p320 = pneg %p131
        %p321 = pneg %p128
        %p322 = pneg %p152
        %p323 = pneg %p149
        %p324 = pneg %p173
        %p325 = pneg %p170
        %p326 = pneg %p199
        %p327 = pneg %p196
        %s328 = sand.u32 %s186, 1
        %s329 = scalar_lea.sflag [#allocation5], %s328
        %s330 = sand.u32 %s186, 1
        %s331 = smul.addr %s330, 2
        %s332 = scalar_lea.vmem [#allocation9], %s331
        %s333 = smul.u32 32, %s26
        %s334 = smul.u32 2, %s26
        %v335 = vld [vmem:[%s291] sm:$0xff]
        %v336 = vld [vmem:[%s291 + $0x8] sm:$0xff]
        %v337 = vld [vmem:[%s291 + $0x10] sm:$0xff]
        %v338 = vld [vmem:[%s291 + $0x18] sm:$0xff]
        %v339 = vld [vmem:[%s291 + $0x20] sm:$0xff]
        %v340 = vld [vmem:[%s291 + $0x28] sm:$0xff]
        %v341 = vld [vmem:[%s291 + $0x30] sm:$0xff]
        %v342 = vld [vmem:[%s291 + $0x38] sm:$0xff]
        %v343 = vld [vmem:[%s291 + $0x40] sm:$0xff]
        %v344 = vld [vmem:[%s291 + $0x48] sm:$0xff]
        %v345 = vld [vmem:[%s291 + $0x50] sm:$0xff]
        %v346 = vld [vmem:[%s291 + $0x58] sm:$0xff]
        %v347 = vld [vmem:[%s291 + $0x60] sm:$0xff]
        %v348 = vld [vmem:[%s291 + $0x68] sm:$0xff]
        %v349 = vld [vmem:[%s291 + $0x70] sm:$0xff]
        %v350 = vld [vmem:[%s291 + $0x78] sm:$0xff]
        %v351 = vld [vmem:[%s291 + $0x80] sm:$0xff]
        %v352 = vld [vmem:[%s291 + $0x88] sm:$0xff]
        %v353 = vld [vmem:[%s291 + $0x90] sm:$0xff]
        %v354 = vld [vmem:[%s291 + $0x98] sm:$0xff]
        %v355 = vld [vmem:[%s291 + $0xa0] sm:$0xff]
        %v356 = vld [vmem:[%s291 + $0xa8] sm:$0xff]
        %v357 = vld [vmem:[%s291 + $0xb0] sm:$0xff]
        %v358 = vld [vmem:[%s291 + $0xb8] sm:$0xff]
        %v359 = vld [vmem:[%s291 + $0xc0] sm:$0xff]
        %v360 = vld [vmem:[%s291 + $0xc8] sm:$0xff]
        %v361 = vld [vmem:[%s291 + $0xd0] sm:$0xff]
        %v362 = vld [vmem:[%s291 + $0xd8] sm:$0xff]
        %v363 = vld [vmem:[%s291 + $0xe0] sm:$0xff]
        %v364 = vld [vmem:[%s291 + $0xe8] sm:$0xff]
        %v365 = vld [vmem:[%s291 + $0xf0] sm:$0xff]
        %v366 = vld [vmem:[%s291 + $0xf8] sm:$0xff]
        %v367 = vpack.c.bf16 %v336, %v335
        %v368 = vpack.c.bf16 %v338, %v337
        %v369 = vpack.c.bf16 %v340, %v339
        %v370 = vpack.c.bf16 %v342, %v341
        %v371 = vpack.c.bf16 %v344, %v343
        %v372 = vpack.c.bf16 %v346, %v345
        %v373 = vpack.c.bf16 %v348, %v347
        %v374 = vpack.c.bf16 %v350, %v349
        %v375 = vpack.c.bf16 %v352, %v351
        %v376 = vpack.c.bf16 %v354, %v353
        %v377 = vpack.c.bf16 %v356, %v355
        %v378 = vpack.c.bf16 %v358, %v357
        %v379 = vpack.c.bf16 %v360, %v359
        %v380 = vpack.c.bf16 %v362, %v361
        %v381 = vpack.c.bf16 %v364, %v363
        %v382 = vpack.c.bf16 %v366, %v365
        %v383 = vld [vmem:[#allocation6] sm:$0xf]
        %v384 = vld [vmem:[#allocation6 + $0x4] sm:$0xf]
        %v385 = vld [vmem:[#allocation6 + $0x8] sm:$0xf]
        %v386 = vld [vmem:[#allocation6 + $0xc] sm:$0xf]
        %v387 = vld [vmem:[#allocation6 + $0x10] sm:$0xf]
        %v388 = vld [vmem:[#allocation6 + $0x14] sm:$0xf]
        %v389 = vld [vmem:[#allocation6 + $0x18] sm:$0xf]
        %v390 = vld [vmem:[#allocation6 + $0x1c] sm:$0xf]
        %v391 = vld [vmem:[#allocation6 + $0x20] sm:$0xf]
        %v392 = vld [vmem:[#allocation6 + $0x24] sm:$0xf]
        %v393 = vld [vmem:[#allocation6 + $0x28] sm:$0xf]
        %v394 = vld [vmem:[#allocation6 + $0x2c] sm:$0xf]
        %v395 = vld [vmem:[#allocation6 + $0x30] sm:$0xf]
        %v396 = vld [vmem:[#allocation6 + $0x34] sm:$0xf]
        %v397 = vld [vmem:[#allocation6 + $0x38] sm:$0xf]
        %v398 = vld [vmem:[#allocation6 + $0x3c] sm:$0xf]
        %v399 = vld [vmem:[%s2] sm:$0x1]
        %v401 = vperm.slane %v399, 0
        %v419 = vunpack.c.l.b16 %v383
        %v420 = vunpack.c.l.b16 %v384
        %v421 = vunpack.c.l.b16 %v385
        %v422 = vunpack.c.l.b16 %v386
        %v423 = vunpack.c.l.b16 %v387
        %v424 = vunpack.c.l.b16 %v388
        %v425 = vunpack.c.l.b16 %v389
        %v426 = vunpack.c.l.b16 %v390
        %v427 = vunpack.c.l.b16 %v391
        %v428 = vunpack.c.l.b16 %v392
        %v429 = vunpack.c.l.b16 %v393
        %v430 = vunpack.c.l.b16 %v394
        %v431 = vunpack.c.l.b16 %v395
        %v432 = vunpack.c.l.b16 %v396
        %v433 = vunpack.c.l.b16 %v397
        %v434 = vunpack.c.l.b16 %v398
        %v435 = vpack.c.b16 %v420, %v419
        %v436 = vpack.c.b16 %v422, %v421
        %v437 = vpack.c.b16 %v424, %v423
        %v438 = vpack.c.b16 %v426, %v425
        %v439 = vpack.c.b16 %v428, %v427
        %v440 = vpack.c.b16 %v430, %v429
        %v441 = vpack.c.b16 %v432, %v431
        %v442 = vpack.c.b16 %v434, %v433
        %451 = vmatpush.bf16.msra.mxu0 %v442
        %452 = vmatpush.bf16.msra.mxu0 %v441
        %453 = vmatpush.bf16.msra.mxu0 %v440
        %454 = vmatpush.bf16.msra.mxu0 %v439
        %455 = vmatpush.bf16.msra.mxu0 %v438
        %456 = vmatpush.bf16.msra.mxu0 %v437
        %457 = vmatpush.bf16.msra.mxu0 %v436
        %458 = vmatpush.bf16.msra.mxu0 %v435
        %459 = vmatmul.bf16.gmra.mxu0 %v367
        %v460 = vpop.f32.mrf.mxu0
        %v461 = vadd.f32 %v401, %v460
        %v462 = vpop.f32.mrf.mxu0
        %v463 = vadd.f32 %v401, %v462
        %464 = vmatmul.bf16.gmra.mxu0 %v368
        %v465 = vpop.f32.mrf.mxu0
        %v466 = vadd.f32 %v401, %v465
        %v467 = vpop.f32.mrf.mxu0
        %v468 = vadd.f32 %v401, %v467
        %469 = vmatmul.bf16.gmra.mxu0 %v369
        %v470 = vpop.f32.mrf.mxu0
        %v471 = vadd.f32 %v401, %v470
        %v472 = vpop.f32.mrf.mxu0
        %v473 = vadd.f32 %v401, %v472
        %474 = vmatmul.bf16.gmra.mxu0 %v370
        %v475 = vpop.f32.mrf.mxu0
        %v476 = vadd.f32 %v401, %v475
        %v477 = vpop.f32.mrf.mxu0
        %v478 = vadd.f32 %v401, %v477
        %479 = vmatmul.bf16.gmra.mxu0 %v371
        %v480 = vpop.f32.mrf.mxu0
        %v481 = vadd.f32 %v401, %v480
        %v482 = vpop.f32.mrf.mxu0
        %v483 = vadd.f32 %v401, %v482
        %484 = vmatmul.bf16.gmra.mxu0 %v372
        %v485 = vpop.f32.mrf.mxu0
        %v486 = vadd.f32 %v401, %v485
        %v487 = vpop.f32.mrf.mxu0
        %v488 = vadd.f32 %v401, %v487
        %489 = vmatmul.bf16.gmra.mxu0 %v373
        %v490 = vpop.f32.mrf.mxu0
        %v491 = vadd.f32 %v401, %v490
        %v492 = vpop.f32.mrf.mxu0
        %v493 = vadd.f32 %v401, %v492
        %494 = vmatmul.bf16.gmra.mxu0 %v374
        %v495 = vpop.f32.mrf.mxu0
        %v496 = vadd.f32 %v401, %v495
        %v497 = vpop.f32.mrf.mxu0
        %v498 = vadd.f32 %v401, %v497
        %499 = vmatmul.bf16.gmra.mxu0 %v375
        %v500 = vpop.f32.mrf.mxu0
        %v501 = vadd.f32 %v401, %v500
        %v502 = vpop.f32.mrf.mxu0
        %v503 = vadd.f32 %v401, %v502
        %504 = vmatmul.bf16.gmra.mxu0 %v376
        %v505 = vpop.f32.mrf.mxu0
        %v506 = vadd.f32 %v401, %v505
        %v507 = vpop.f32.mrf.mxu0
        %v508 = vadd.f32 %v401, %v507
        %509 = vmatmul.bf16.gmra.mxu0 %v377
        %v510 = vpop.f32.mrf.mxu0
        %v511 = vadd.f32 %v401, %v510
        %v512 = vpop.f32.mrf.mxu0
        %v513 = vadd.f32 %v401, %v512
        %514 = vmatmul.bf16.gmra.mxu0 %v378
        %v515 = vpop.f32.mrf.mxu0
        %v516 = vadd.f32 %v401, %v515
        %v517 = vpop.f32.mrf.mxu0
        %v518 = vadd.f32 %v401, %v517
        %519 = vmatmul.bf16.gmra.mxu0 %v379
        %v520 = vpop.f32.mrf.mxu0
        %v521 = vadd.f32 %v401, %v520
        %v522 = vpop.f32.mrf.mxu0
        %v523 = vadd.f32 %v401, %v522
        %524 = vmatmul.bf16.gmra.mxu0 %v380
        %v525 = vpop.f32.mrf.mxu0
        %v526 = vadd.f32 %v401, %v525
        %v527 = vpop.f32.mrf.mxu0
        %v528 = vadd.f32 %v401, %v527
        %529 = vmatmul.bf16.gmra.mxu0 %v381
        %v530 = vpop.f32.mrf.mxu0
        %v531 = vadd.f32 %v401, %v530
        %v532 = vpop.f32.mrf.mxu0
        %v533 = vadd.f32 %v401, %v532
        %534 = vmatmul.bf16.gmra.mxu0 %v382
        %v535 = vpop.f32.mrf.mxu0
        %v536 = vadd.f32 %v401, %v535
        %v537 = vpop.f32.mrf.mxu0
        %v538 = vadd.f32 %v401, %v537
        %539 = vdwg.mxu0
        %v540 = vmul.f32 %v461, 0.2
        %v541 = vmul.f32 %v463, 0.2
        %v542 = vmul.f32 %v466, 0.2
        %v543 = vmul.f32 %v468, 0.2
        %v544 = vmul.f32 %v471, 0.2
        %v545 = vmul.f32 %v473, 0.2
        %v546 = vmul.f32 %v476, 0.2
        %v547 = vmul.f32 %v478, 0.2
        %v548 = vmul.f32 %v481, 0.2
        %v549 = vmul.f32 %v483, 0.2
        %v550 = vmul.f32 %v486, 0.2
        %v551 = vmul.f32 %v488, 0.2
        %v552 = vmul.f32 %v491, 0.2
        %v553 = vmul.f32 %v493, 0.2
        %v554 = vmul.f32 %v496, 0.2
        %v555 = vmul.f32 %v498, 0.2
        %v556 = vmul.f32 %v501, 0.2
        %v557 = vmul.f32 %v503, 0.2
        %v558 = vmul.f32 %v506, 0.2
        %v559 = vmul.f32 %v508, 0.2
        %v560 = vmul.f32 %v511, 0.2
        %v561 = vmul.f32 %v513, 0.2
        %v562 = vmul.f32 %v516, 0.2
        %v563 = vmul.f32 %v518, 0.2
        %v564 = vmul.f32 %v521, 0.2
        %v565 = vmul.f32 %v523, 0.2
        %v566 = vmul.f32 %v526, 0.2
        %v567 = vmul.f32 %v528, 0.2
        %v568 = vmul.f32 %v531, 0.2
        %v569 = vmul.f32 %v533, 0.2
        %v570 = vmul.f32 %v536, 0.2
        %v571 = vmul.f32 %v538, 0.2
        %v572 = vmax.f32 %v461, %v540
        %v573 = vmax.f32 %v463, %v541
        %v574 = vmax.f32 %v466, %v542
        %v575 = vmax.f32 %v468, %v543
        %v576 = vmax.f32 %v471, %v544
        %v577 = vmax.f32 %v473, %v545
        %v578 = vmax.f32 %v476, %v546
        %v579 = vmax.f32 %v478, %v547
        %v580 = vmax.f32 %v481, %v548
        %v581 = vmax.f32 %v483, %v549
        %v582 = vmax.f32 %v486, %v550
        %v583 = vmax.f32 %v488, %v551
        %v584 = vmax.f32 %v491, %v552
        %v585 = vmax.f32 %v493, %v553
        %v586 = vmax.f32 %v496, %v554
        %v587 = vmax.f32 %v498, %v555
        %v588 = vmax.f32 %v501, %v556
        %v589 = vmax.f32 %v503, %v557
        %v590 = vmax.f32 %v506, %v558
        %v591 = vmax.f32 %v508, %v559
        %v592 = vmax.f32 %v511, %v560
        %v593 = vmax.f32 %v513, %v561
        %v594 = vmax.f32 %v516, %v562
        %v595 = vmax.f32 %v518, %v563
        %v596 = vmax.f32 %v521, %v564
        %v597 = vmax.f32 %v523, %v565
        %v598 = vmax.f32 %v526, %v566
        %v599 = vmax.f32 %v528, %v567
        %v600 = vmax.f32 %v531, %v568
        %v601 = vmax.f32 %v533, %v569
        %v602 = vmax.f32 %v536, %v570
        %v603 = vmax.f32 %v538, %v571
        %v604 = vpack.c.bf16 %v573, %v572
        %v605 = vpack.c.bf16 %v575, %v574
        %v606 = vpack.c.bf16 %v577, %v576
        %v607 = vpack.c.bf16 %v579, %v578
        %v608 = vpack.c.bf16 %v581, %v580
        %v609 = vpack.c.bf16 %v583, %v582
        %v610 = vpack.c.bf16 %v585, %v584
        %v611 = vpack.c.bf16 %v587, %v586
        %v612 = vpack.c.bf16 %v589, %v588
        %v613 = vpack.c.bf16 %v591, %v590
        %v614 = vpack.c.bf16 %v593, %v592
        %v615 = vpack.c.bf16 %v595, %v594
        %v616 = vpack.c.bf16 %v597, %v596
        %v617 = vpack.c.bf16 %v599, %v598
        %v618 = vpack.c.bf16 %v601, %v600
        %v619 = vpack.c.bf16 %v603, %v602
        %v620 = vld [vmem:[#allocation8] sm:$0xf]
        %v621 = vld [vmem:[#allocation8 + $0x4] sm:$0xf]
        %v622 = vld [vmem:[#allocation8 + $0x8] sm:$0xf]
        %v623 = vld [vmem:[#allocation8 + $0xc] sm:$0xf]
        %v624 = vld [vmem:[#allocation8 + $0x10] sm:$0xf]
        %v625 = vld [vmem:[#allocation8 + $0x14] sm:$0xf]
        %v626 = vld [vmem:[#allocation8 + $0x18] sm:$0xf]
        %v627 = vld [vmem:[#allocation8 + $0x1c] sm:$0xf]
        %v628 = vld [vmem:[#allocation8 + $0x20] sm:$0xf]
        %v629 = vld [vmem:[#allocation8 + $0x24] sm:$0xf]
        %v630 = vld [vmem:[#allocation8 + $0x28] sm:$0xf]
        %v631 = vld [vmem:[#allocation8 + $0x2c] sm:$0xf]
        %v632 = vld [vmem:[#allocation8 + $0x30] sm:$0xf]
        %v633 = vld [vmem:[#allocation8 + $0x34] sm:$0xf]
        %v634 = vld [vmem:[#allocation8 + $0x38] sm:$0xf]
        %v635 = vld [vmem:[#allocation8 + $0x3c] sm:$0xf]
        %v636 = vld [vmem:[%s4] sm:$0x1]
        %v638 = vperm.slane %v636, 0
        %v656 = vunpack.c.l.b16 %v620
        %v657 = vunpack.c.l.b16 %v621
        %v658 = vunpack.c.l.b16 %v622
        %v659 = vunpack.c.l.b16 %v623
        %v660 = vunpack.c.l.b16 %v624
        %v661 = vunpack.c.l.b16 %v625
        %v662 = vunpack.c.l.b16 %v626
        %v663 = vunpack.c.l.b16 %v627
        %v664 = vunpack.c.l.b16 %v628
        %v665 = vunpack.c.l.b16 %v629
        %v666 = vunpack.c.l.b16 %v630
        %v667 = vunpack.c.l.b16 %v631
        %v668 = vunpack.c.l.b16 %v632
        %v669 = vunpack.c.l.b16 %v633
        %v670 = vunpack.c.l.b16 %v634
        %v671 = vunpack.c.l.b16 %v635
        %v672 = vpack.c.b16 %v657, %v656
        %v673 = vpack.c.b16 %v659, %v658
        %v674 = vpack.c.b16 %v661, %v660
        %v675 = vpack.c.b16 %v663, %v662
        %v676 = vpack.c.b16 %v665, %v664
        %v677 = vpack.c.b16 %v667, %v666
        %v678 = vpack.c.b16 %v669, %v668
        %v679 = vpack.c.b16 %v671, %v670
        %688 = vmatpush.bf16.msra.mxu0 %v679
        %689 = vmatpush.bf16.msra.mxu0 %v678
        %690 = vmatpush.bf16.msra.mxu0 %v677
        %691 = vmatpush.bf16.msra.mxu0 %v676
        %692 = vmatpush.bf16.msra.mxu0 %v675
        %693 = vmatpush.bf16.msra.mxu0 %v674
        %694 = vmatpush.bf16.msra.mxu0 %v673
        %695 = vmatpush.bf16.msra.mxu0 %v672
        %696 = vmatmul.bf16.gmra.mxu0 %v604
        %v697 = vpop.f32.mrf.mxu0
        %v698 = vadd.f32 %v638, %v697
        %v699 = vpop.f32.mrf.mxu0
        %v700 = vadd.f32 %v638, %v699
        %701 = vmatmul.bf16.gmra.mxu0 %v605
        %v702 = vpop.f32.mrf.mxu0
        %v703 = vadd.f32 %v638, %v702
        %v704 = vpop.f32.mrf.mxu0
        %v705 = vadd.f32 %v638, %v704
        %706 = vmatmul.bf16.gmra.mxu0 %v606
        %v707 = vpop.f32.mrf.mxu0
        %v708 = vadd.f32 %v638, %v707
        %v709 = vpop.f32.mrf.mxu0
        %v710 = vadd.f32 %v638, %v709
        %711 = vmatmul.bf16.gmra.mxu0 %v607
        %v712 = vpop.f32.mrf.mxu0
        %v713 = vadd.f32 %v638, %v712
        %v714 = vpop.f32.mrf.mxu0
        %v715 = vadd.f32 %v638, %v714
        %716 = vmatmul.bf16.gmra.mxu0 %v608
        %v717 = vpop.f32.mrf.mxu0
        %v718 = vadd.f32 %v638, %v717
        %v719 = vpop.f32.mrf.mxu0
        %v720 = vadd.f32 %v638, %v719
        %721 = vmatmul.bf16.gmra.mxu0 %v609
        %v722 = vpop.f32.mrf.mxu0
        %v723 = vadd.f32 %v638, %v722
        %v724 = vpop.f32.mrf.mxu0
        %v725 = vadd.f32 %v638, %v724
        %726 = vmatmul.bf16.gmra.mxu0 %v610
        %v727 = vpop.f32.mrf.mxu0
        %v728 = vadd.f32 %v638, %v727
        %v729 = vpop.f32.mrf.mxu0
        %v730 = vadd.f32 %v638, %v729
        %731 = vmatmul.bf16.gmra.mxu0 %v611
        %v732 = vpop.f32.mrf.mxu0
        %v733 = vadd.f32 %v638, %v732
        %v734 = vpop.f32.mrf.mxu0
        %v735 = vadd.f32 %v638, %v734
        %736 = vmatmul.bf16.gmra.mxu0 %v612
        %v737 = vpop.f32.mrf.mxu0
        %v738 = vadd.f32 %v638, %v737
        %v739 = vpop.f32.mrf.mxu0
        %v740 = vadd.f32 %v638, %v739
        %741 = vmatmul.bf16.gmra.mxu0 %v613
        %v742 = vpop.f32.mrf.mxu0
        %v743 = vadd.f32 %v638, %v742
        %v744 = vpop.f32.mrf.mxu0
        %v745 = vadd.f32 %v638, %v744
        %746 = vmatmul.bf16.gmra.mxu0 %v614
        %v747 = vpop.f32.mrf.mxu0
        %v748 = vadd.f32 %v638, %v747
        %v749 = vpop.f32.mrf.mxu0
        %v750 = vadd.f32 %v638, %v749
        %751 = vmatmul.bf16.gmra.mxu0 %v615
        %v752 = vpop.f32.mrf.mxu0
        %v753 = vadd.f32 %v638, %v752
        %v754 = vpop.f32.mrf.mxu0
        %v755 = vadd.f32 %v638, %v754
        %756 = vmatmul.bf16.gmra.mxu0 %v616
        %v757 = vpop.f32.mrf.mxu0
        %v758 = vadd.f32 %v638, %v757
        %v759 = vpop.f32.mrf.mxu0
        %v760 = vadd.f32 %v638, %v759
        %761 = vmatmul.bf16.gmra.mxu0 %v617
        %v762 = vpop.f32.mrf.mxu0
        %v763 = vadd.f32 %v638, %v762
        %v764 = vpop.f32.mrf.mxu0
        %v765 = vadd.f32 %v638, %v764
        %766 = vmatmul.bf16.gmra.mxu0 %v618
        %v767 = vpop.f32.mrf.mxu0
        %v768 = vadd.f32 %v638, %v767
        %v769 = vpop.f32.mrf.mxu0
        %v770 = vadd.f32 %v638, %v769
        %771 = vmatmul.bf16.gmra.mxu0 %v619
        %v772 = vpop.f32.mrf.mxu0
        %v773 = vadd.f32 %v638, %v772
        %v774 = vpop.f32.mrf.mxu0
        %v775 = vadd.f32 %v638, %v774
        %776 = vdwg.mxu0
        %v777 = vmul.f32 %v698, 0.2
        %v778 = vmul.f32 %v700, 0.2
        %v779 = vmul.f32 %v703, 0.2
        %v780 = vmul.f32 %v705, 0.2
        %v781 = vmul.f32 %v708, 0.2
        %v782 = vmul.f32 %v710, 0.2
        %v783 = vmul.f32 %v713, 0.2
        %v784 = vmul.f32 %v715, 0.2
        %v785 = vmul.f32 %v718, 0.2
        %v786 = vmul.f32 %v720, 0.2
        %v787 = vmul.f32 %v723, 0.2
        %v788 = vmul.f32 %v725, 0.2
        %v789 = vmul.f32 %v728, 0.2
        %v790 = vmul.f32 %v730, 0.2
        %v791 = vmul.f32 %v733, 0.2
        %v792 = vmul.f32 %v735, 0.2
        %v793 = vmul.f32 %v738, 0.2
        %v794 = vmul.f32 %v740, 0.2
        %v795 = vmul.f32 %v743, 0.2
        %v796 = vmul.f32 %v745, 0.2
        %v797 = vmul.f32 %v748, 0.2
        %v798 = vmul.f32 %v750, 0.2
        %v799 = vmul.f32 %v753, 0.2
        %v800 = vmul.f32 %v755, 0.2
        %v801 = vmul.f32 %v758, 0.2
        %v802 = vmul.f32 %v760, 0.2
        %v803 = vmul.f32 %v763, 0.2
        %v804 = vmul.f32 %v765, 0.2
        %v805 = vmul.f32 %v768, 0.2
        %v806 = vmul.f32 %v770, 0.2
        %v807 = vmul.f32 %v773, 0.2
        %v808 = vmul.f32 %v775, 0.2
        %v809 = vmax.f32 %v698, %v777
        %v810 = vmax.f32 %v700, %v778
        %v811 = vmax.f32 %v703, %v779
        %v812 = vmax.f32 %v705, %v780
        %v813 = vmax.f32 %v708, %v781
        %v814 = vmax.f32 %v710, %v782
        %v815 = vmax.f32 %v713, %v783
        %v816 = vmax.f32 %v715, %v784
        %v817 = vmax.f32 %v718, %v785
        %v818 = vmax.f32 %v720, %v786
        %v819 = vmax.f32 %v723, %v787
        %v820 = vmax.f32 %v725, %v788
        %v821 = vmax.f32 %v728, %v789
        %v822 = vmax.f32 %v730, %v790
        %v823 = vmax.f32 %v733, %v791
        %v824 = vmax.f32 %v735, %v792
        %v825 = vmax.f32 %v738, %v793
        %v826 = vmax.f32 %v740, %v794
        %v827 = vmax.f32 %v743, %v795
        %v828 = vmax.f32 %v745, %v796
        %v829 = vmax.f32 %v748, %v797
        %v830 = vmax.f32 %v750, %v798
        %v831 = vmax.f32 %v753, %v799
        %v832 = vmax.f32 %v755, %v800
        %v833 = vmax.f32 %v758, %v801
        %v834 = vmax.f32 %v760, %v802
        %v835 = vmax.f32 %v763, %v803
        %v836 = vmax.f32 %v765, %v804
        %v837 = vmax.f32 %v768, %v805
        %v838 = vmax.f32 %v770, %v806
        %v839 = vmax.f32 %v773, %v807
        %v840 = vmax.f32 %v775, %v808
        %v841 = vld [vmem:[%s5] sm:$0x1]
        %s842 = sld [smem:[#allocation2]]
        %v843 = vstv %s842
        %844 = vmatpush.xpose.msra.mxu0 %v824
        %845 = vmatpush.xpose.msra.mxu0 %v823
        %846 = vmatpush.xpose.msra.mxu0 %v822
        %847 = vmatpush.xpose.msra.mxu0 %v821
        %848 = vmatpush.xpose.msra.mxu0 %v820
        %849 = vmatpush.xpose.msra.mxu0 %v819
        %850 = vmatpush.xpose.msra.mxu0 %v818
        %851 = vmatpush.xpose.msra.mxu0 %v817
        %852 = vmatpush.xpose.msra.mxu0 %v816
        %853 = vmatpush.xpose.msra.mxu0 %v815
        %854 = vmatpush.xpose.msra.mxu0 %v814
        %855 = vmatpush.xpose.msra.mxu0 %v813
        %856 = vmatpush.xpose.msra.mxu0 %v812
        %857 = vmatpush.xpose.msra.mxu0 %v811
        %858 = vmatpush.xpose.msra.mxu0 %v810
        %859 = vmatpush.xpose.msra.mxu0 %v809
        %860 = vmatmul.f32.gmra.mxu0 %v841
        %v861 = vpop.f32.mrf.mxu0
        %v862 = vadd.f32 %v843, %v861
        %863 = vdwg.mxu0
        %864 = vmatpush.xpose.msra.mxu0 %v840
        %865 = vmatpush.xpose.msra.mxu0 %v839
        %866 = vmatpush.xpose.msra.mxu0 %v838
        %867 = vmatpush.xpose.msra.mxu0 %v837
        %868 = vmatpush.xpose.msra.mxu0 %v836
        %869 = vmatpush.xpose.msra.mxu0 %v835
        %870 = vmatpush.xpose.msra.mxu0 %v834
        %871 = vmatpush.xpose.msra.mxu0 %v833
        %872 = vmatpush.xpose.msra.mxu0 %v832
        %873 = vmatpush.xpose.msra.mxu0 %v831
        %874 = vmatpush.xpose.msra.mxu0 %v830
        %875 = vmatpush.xpose.msra.mxu0 %v829
        %876 = vmatpush.xpose.msra.mxu0 %v828
        %877 = vmatpush.xpose.msra.mxu0 %v827
        %878 = vmatpush.xpose.msra.mxu0 %v826
        %879 = vmatpush.xpose.msra.mxu0 %v825
        %880 = vmatmul.f32.gmra.mxu0 %v841
        %v881 = vpop.f32.mrf.mxu0
        %v882 = vadd.f32 %v843, %v881
        %883 = vdwg.mxu0
        %v884 = vxor.u32 %v862, 2147483648
        %v885 = vxor.u32 %v882, 2147483648
        %v886 = vmul.f32 %v884, 1.442695
        %v887 = vpow.pop %v886
        %v888 = vmul.f32 %v885, 1.442695
        %v889 = vpow.pop %v888
        %v890 = vadd.f32 %v887, 1.0
        %v891 = vadd.f32 %v889, 1.0
        %v892 = vrcp.pop %v890
        %v893 = vmul.f32 %v890, %v892
        %v894 = vsub.f32 1.0, %v893
        %v895 = vmul.f32 %v892, %v894
        %v896 = vadd.f32 %v892, %v895
        %vm897 = vweird.f32 %v890
        %vm898 = vweird.f32 %v892
        %vm899 = vmor %vm897, %vm898
        %v900 = vsel %vm899, %v892, %v896
        %v901 = vand.u32 2147483647, %v890
        %vm902 = vcmp.eq.f32.partialorder %v901, 8.507059e+37
        %v903 = vand.u32 %v890, 2147483648
        %v904 = vor.u32 1.1754944e-38, %v903
        %v905 = vsel %vm902, %v904, %v900
        %v906 = vmul.f32 1.0, %v905
        %v907 = vrcp.pop %v891
        %v908 = vmul.f32 %v891, %v907
        %v909 = vsub.f32 1.0, %v908
        %v910 = vmul.f32 %v907, %v909
        %v911 = vadd.f32 %v907, %v910
        %vm912 = vweird.f32 %v891
        %vm913 = vweird.f32 %v907
        %vm914 = vmor %vm912, %vm913
        %v915 = vsel %vm914, %v907, %v911
        %v916 = vand.u32 2147483647, %v891
        %vm917 = vcmp.eq.f32.partialorder %v916, 8.507059e+37
        %v918 = vand.u32 %v891, 2147483648
        %v919 = vor.u32 1.1754944e-38, %v918
        %v920 = vsel %vm917, %v919, %v915
        %v921 = vmul.f32 1.0, %v920
        %v924 = vrot.slane %v921, 7
        %vm925 = vcmask 1040384
        %v926 = vsel %vm925, %v906, %v924
        %v928 = vlaneseq
        %vm929 = vcmp.ge.s32.totalorder %v928, 0
        %vm930 = vcmp.lt.s32.totalorder %v928, 256
        %vm931 = vmand %vm929, %vm930
        %932 = vst.msk [vmem:[%s332] sm:$0x3] %vm931, %v926
        %s933 = sand.u32 %s186, 1
        %s934 = scalar_lea.sflag [#allocation5], %s933
        %s935 = sand.u32 %s186, 1
        %s936 = smul.addr %s935, 2
        %s937 = scalar_lea.vmem [#allocation9], %s936
        // Predicated region
        $region61: #{fc3_forward.1} parent=47 // pred_check
          %p938 = pneg %p196
        $region62: #{fc3_forward.1} parent=47 // pred_check_branch
          %940 = sbr.rel (%p938) target = $region64
        $region63: #{fc3_forward.1} parent=47 // pred_region
          %s941 = smul.u32 2, %s26
          %943 = vsyncadd %s934, 0
          %s944 = scalar_lea.hbm %s7, %s941
          %s946 = sshll.u32 %s937, 4
          %s947 = int_to_ptr.vmem [resolvable:$true] %s946
          %s948 = sshll.u32 %s944, 4
          %s949 = int_to_ptr.hbm [resolvable:$true] %s948
          %951 = dma.vmem_to_hbm [thread:$0]  %s947, 32, %s949, %s934
        $region64: #{fc3_forward.1} parent=47 // pred_fallthru
          _
      $region48: #{fc3_forward.1} parent=5 // pred_fallthru
        _
      %p952 = scmp.le.s32.totalorder 2, %s21
      // Predicated region
      $region65: #{fc3_forward.1} parent=5 // pred_check
        %p953 = pneg %p952
      $region66: #{fc3_forward.1} parent=5 // pred_check_branch
        %955 = sbr.rel (%p953) target = $region68
      $region67: #{fc3_forward.1} parent=5 // pred_region
        %s956 = ssub.s32 %s21, 2
        // Predicated region
        $region69: #{fc3_forward.1} parent=67 // pred_check
          %p957 = pneg %p202
        $region70: #{fc3_forward.1} parent=67 // pred_check_branch
          %959 = sbr.rel (%p957) target = $region72
        $region71: #{fc3_forward.1} parent=67 // pred_region
          %s960 = sand.u32 %s187, 1
          %s961 = scalar_lea.sflag [#allocation5], %s960
          %s962 = sand.u32 %s187, 1
          %s963 = smul.addr %s962, 2
          %s964 = scalar_lea.vmem [#allocation9], %s963
          %966 = dma.done %s961, 32
        $region72: #{fc3_forward.1} parent=67 // pred_fallthru
          _
      $region68: #{fc3_forward.1} parent=5 // pred_fallthru
        _
    $region6: #{fc3_forward.1} parent=1 // loop_footer
      %s25 = sadd.s32 1, %s21
    $region7: #{fc3_forward.1} parent=1 // loop_footer_branch
      %20 = sbr.rel target = $region3
    $region8: #{fc3_forward.1} parent=1 // loop_exit
      _
    %967 = vsyncpa [#allocation4], 1
    %s968 = scalar_lea.sflag [#allocation4], 1
    %969 = vsyncpa %s968, 1
    %970 = vsyncpa [#allocation7], 1
    %971 = vsyncpa [#allocation5], 1
    %s972 = scalar_lea.sflag [#allocation5], 1
    %973 = vsyncpa %s972, 1

</llo_original>
